<compile_context>
chip_gen: v7x
topology: tpu7x:2x2x1
jax: 0.10.0
libtpu: 0.0.40
codegen_flags: <defaults>
</compile_context>

<pallas_src>
import jax
import jax.numpy as jnp
from jax.experimental import pallas as pl
from jax.experimental.pallas import tpu as pltpu

_LANE = 128
_NEG = -1e30  # bias pad value for unused logit lanes -> exp() underflows to 0


def _round_up(n, m):
    return -(-n // m) * m


def _dqn_forward_kernel(x_ref,
                        w1_ref, b1_ref,
                        w2_ref, b2_ref,
                        w3_ref, b3_ref,
                        w4_ref, b4_ref,
                        out_ref):
    """Fused MLP forward: 3x (Linear + ReLU), Linear, stable softmax."""
    x = x_ref[...]  # (TB, 11) bf16

    # f1 + ReLU  (bf16 MXU operands, f32 accumulate / elementwise)
    h = jnp.dot(x, w1_ref[...], preferred_element_type=jnp.float32) + b1_ref[...]
    h = jnp.maximum(h, 0.0).astype(jnp.bfloat16)

    # f2 + ReLU
    h = jnp.dot(h, w2_ref[...], preferred_element_type=jnp.float32) + b2_ref[...]
    h = jnp.maximum(h, 0.0).astype(jnp.bfloat16)

    # f3 + ReLU
    h = jnp.dot(h, w3_ref[...], preferred_element_type=jnp.float32) + b3_ref[...]
    h = jnp.maximum(h, 0.0).astype(jnp.bfloat16)

    # f4 (logits, lane-padded to 128; padded lanes carry a -1e30 bias)
    logits = jnp.dot(h, w4_ref[...], preferred_element_type=jnp.float32) + b4_ref[...]

    # numerically stable softmax over the padded lane axis
    m = jnp.max(logits, axis=-1, keepdims=True)
    e = jnp.exp(logits - m)
    denom = jnp.sum(e, axis=-1, keepdims=True)
    out_ref[...] = e * pl.reciprocal(denom, approx=True)


def _pad_cols(a, n, value=0.0):
    pad = n - a.shape[1]
    if pad == 0:
        return a
    return jnp.pad(a, ((0, 0), (0, pad)), constant_values=value)


def _pad_rows(a, n):
    pad = n - a.shape[0]
    if pad == 0:
        return a
    return jnp.pad(a, ((0, pad), (0, 0)))


@jax.jit
def dqn_forward(x, params):
    """x: [B, 11] float32 -> [B, 3] softmax probabilities."""
    w1, b1, w2, b2, w3, b3, w4, b4 = params
    B, D = x.shape
    H1, H2, H3, NOUT = w1.shape[1], w2.shape[1], w3.shape[1], w4.shape[1]
    H1p, H2p, H3p = (_round_up(h, _LANE) for h in (H1, H2, H3))
    NOUTp = _round_up(NOUT, _LANE)

    # Pad every layer width up to the 128-lane boundary.  Zero weights/biases
    # keep semantics exact (padded hidden units are identically 0 after ReLU);
    # padded logit lanes get a -1e30 bias so they vanish under softmax.
    w1p = _pad_cols(w1, H1p).astype(jnp.bfloat16)
    b1p = _pad_cols(b1, H1p)
    w2p = _pad_cols(_pad_rows(w2, H1p), H2p).astype(jnp.bfloat16)
    b2p = _pad_cols(b2, H2p)
    w3p = _pad_cols(_pad_rows(w3, H2p), H3p).astype(jnp.bfloat16)
    b3p = _pad_cols(b3, H3p)
    w4p = _pad_cols(_pad_rows(w4, H3p), NOUTp).astype(jnp.bfloat16)
    b4p = _pad_cols(b4, NOUTp, value=_NEG)
    xb = x.astype(jnp.bfloat16)

    # Batch tile: biggest that fits comfortably on all generations (well under
    # v5e's 16 MiB default scoped VMEM even with double buffering).
    TB = B if B <= 1024 else 1024
    n_tiles = pl.cdiv(B, TB)

    def resident(a):  # weights/biases: same block every step -> stay in VMEM
        return pl.BlockSpec(a.shape, lambda i: (0,) * a.ndim)

    flops = 2 * B * (D * H1p + H1p * H2p + H2p * H3p + H3p * NOUTp)
    bytes_accessed = (xb.size * 2 + B * NOUTp * 4
                      + sum(w.size * 2 for w in (w1p, w2p, w3p, w4p))
                      + sum(b.size * 4 for b in (b1p, b2p, b3p, b4p)))

    out_padded = pl.pallas_call(
        _dqn_forward_kernel,
        out_shape=jax.ShapeDtypeStruct((B, NOUTp), jnp.float32),
        grid=(n_tiles,),
        in_specs=[pl.BlockSpec((TB, D), lambda i: (i, 0)),
                  resident(w1p), resident(b1p),
                  resident(w2p), resident(b2p),
                  resident(w3p), resident(b3p),
                  resident(w4p), resident(b4p)],
        out_specs=pl.BlockSpec((TB, NOUTp), lambda i: (i, 0)),
        compiler_params=pltpu.CompilerParams(
            dimension_semantics=("parallel",)),
        cost_estimate=pl.CostEstimate(
            flops=flops, transcendentals=B * NOUTp,
            bytes_accessed=bytes_accessed),
    )(xb, w1p, b1p, w2p, b2p, w3p, b3p, w4p, b4p)

    return out_padded[:, :NOUT]


def init_params(key, first_layer, second_layer, third_layer):
    """Deterministic init mimicking torch.nn.Linear (U(-1/sqrt(fan_in), +1/sqrt(fan_in)))."""
    dims = [(11, first_layer),
            (first_layer, second_layer),
            (second_layer, third_layer),
            (third_layer, 3)]
    params = []
    for (fan_in, fan_out) in dims:
        key, kw, kb = jax.random.split(key, 3)
        bound = 1.0 / (fan_in ** 0.5)
        w = jax.random.uniform(kw, (fan_in, fan_out), jnp.float32, -bound, bound)
        b = jax.random.uniform(kb, (1, fan_out), jnp.float32, -bound, bound)
        params.extend([w, b])
    return tuple(params)


def reference_forward(x, params):
    """Plain-JAX f32 reference matching the PyTorch module semantics."""
    w1, b1, w2, b2, w3, b3, w4, b4 = params
    h = jax.nn.relu(x @ w1 + b1)
    h = jax.nn.relu(h @ w2 + b2)
    h = jax.nn.relu(h @ w3 + b3)
    return jax.nn.softmax(h @ w4 + b4, axis=-1)


if __name__ == "__main__":
    key = jax.random.PRNGKey(0)
    k_x, k_p = jax.random.split(key)

    # Small, forward-consistent shapes: batch=8 states of 11 features,
    # hidden layer sizes (first/second/third) = 64/128/32.
    batch = 8
    first_layer, second_layer, third_layer = 64, 128, 32

    x = jax.random.uniform(k_x, (batch, 11), jnp.float32)
    params = init_params(k_p, first_layer, second_layer, third_layer)

    out = jax.block_until_ready(dqn_forward(x, params))
    ref = reference_forward(x, params)

    assert out.shape == (batch, 3)
    # bf16 MXU operands + approx reciprocal -> loosened tolerance vs f32 ref.
    assert jnp.allclose(out, ref, atol=2e-2, rtol=2e-2)
    # softmax rows sum to ~1 (approx reciprocal has ~2^-12 relative error)
    assert jnp.allclose(jnp.sum(out, axis=-1), jnp.ones((batch,)), atol=1e-2)

    print("KERNEL_OK")
</pallas_src>

<mosaic_0001>
module attributes {stable_mosaic.version = 11 : i64} {
  func.func @_dqn_forward_kernel(%arg0: i32, %arg1: memref<8x11xbf16, #tpu.memory_space<vmem>>, %arg2: memref<11x128xbf16, #tpu.memory_space<vmem>>, %arg3: memref<1x128xf32, #tpu.memory_space<vmem>>, %arg4: memref<128x128xbf16, #tpu.memory_space<vmem>>, %arg5: memref<1x128xf32, #tpu.memory_space<vmem>>, %arg6: memref<128x128xbf16, #tpu.memory_space<vmem>>, %arg7: memref<1x128xf32, #tpu.memory_space<vmem>>, %arg8: memref<128x128xbf16, #tpu.memory_space<vmem>>, %arg9: memref<1x128xf32, #tpu.memory_space<vmem>>, %arg10: memref<8x128xf32, #tpu.memory_space<vmem>>) attributes {dimension_semantics = [#tpu.dimension_semantics<parallel>], iteration_bounds = array<i64: 1>, scalar_prefetch = 0 : i64, scratch_operands = 0 : i64, tpu.core_type = #tpu.core_type<tc>, window_params = [{transform_indices = @transform_0, window_bounds = array<i64: 8, 11>}, {pipeline_mode = #tpu.pipeline_mode<synchronous>, transform_indices = @transform_1, window_bounds = array<i64: 11, 128>}, {pipeline_mode = #tpu.pipeline_mode<synchronous>, transform_indices = @transform_2, window_bounds = array<i64: 1, 128>}, {pipeline_mode = #tpu.pipeline_mode<synchronous>, transform_indices = @transform_3, window_bounds = array<i64: 128, 128>}, {pipeline_mode = #tpu.pipeline_mode<synchronous>, transform_indices = @transform_4, window_bounds = array<i64: 1, 128>}, {pipeline_mode = #tpu.pipeline_mode<synchronous>, transform_indices = @transform_5, window_bounds = array<i64: 128, 128>}, {pipeline_mode = #tpu.pipeline_mode<synchronous>, transform_indices = @transform_6, window_bounds = array<i64: 1, 128>}, {pipeline_mode = #tpu.pipeline_mode<synchronous>, transform_indices = @transform_7, window_bounds = array<i64: 128, 128>}, {pipeline_mode = #tpu.pipeline_mode<synchronous>, transform_indices = @transform_8, window_bounds = array<i64: 1, 128>}, {transform_indices = @transform_9, window_bounds = array<i64: 8, 128>}]} {
    %c0 = arith.constant 0 : index
    %c0_0 = arith.constant 0 : index
    %0 = vector.load %arg1[%c0, %c0_0] : memref<8x11xbf16, #tpu.memory_space<vmem>>, vector<8x11xbf16>
    %c0_1 = arith.constant 0 : index
    %c0_2 = arith.constant 0 : index
    %1 = vector.load %arg2[%c0_1, %c0_2] : memref<11x128xbf16, #tpu.memory_space<vmem>>, vector<11x128xbf16>
    %cst = arith.constant dense<0.000000e+00> : vector<8x128xf32>
    %2 = tpu.matmul %0, %1, %cst {dimension_numbers = #tpu.dot_dimension_numbers<[1], [0], [0], [1], [0, 0, 1, 1], [], []>} : vector<8x11xbf16>, vector<11x128xbf16>, vector<8x128xf32> -> vector<8x128xf32>
    %c0_3 = arith.constant 0 : index
    %c0_4 = arith.constant 0 : index
    %3 = vector.load %arg3[%c0_3, %c0_4] : memref<1x128xf32, #tpu.memory_space<vmem>>, vector<1x128xf32>
    %4 = vector.broadcast %3 : vector<1x128xf32> to vector<8x128xf32>
    %5 = arith.addf %2, %4 : vector<8x128xf32>
    %cst_5 = arith.constant 0.000000e+00 : f32
    %6 = vector.broadcast %cst_5 : f32 to vector<8x128xf32>
    %7 = arith.maximumf %5, %6 : vector<8x128xf32>
    %8 = arith.truncf %7 : vector<8x128xf32> to vector<8x128xbf16>
    %c0_6 = arith.constant 0 : index
    %c0_7 = arith.constant 0 : index
    %9 = vector.load %arg4[%c0_6, %c0_7] : memref<128x128xbf16, #tpu.memory_space<vmem>>, vector<128x128xbf16>
    %cst_8 = arith.constant dense<0.000000e+00> : vector<8x128xf32>
    %10 = tpu.matmul %8, %9, %cst_8 {dimension_numbers = #tpu.dot_dimension_numbers<[1], [0], [0], [1], [0, 0, 1, 1], [], []>} : vector<8x128xbf16>, vector<128x128xbf16>, vector<8x128xf32> -> vector<8x128xf32>
    %c0_9 = arith.constant 0 : index
    %c0_10 = arith.constant 0 : index
    %11 = vector.load %arg5[%c0_9, %c0_10] : memref<1x128xf32, #tpu.memory_space<vmem>>, vector<1x128xf32>
    %12 = vector.broadcast %11 : vector<1x128xf32> to vector<8x128xf32>
    %13 = arith.addf %10, %12 : vector<8x128xf32>
    %cst_11 = arith.constant 0.000000e+00 : f32
    %14 = vector.broadcast %cst_11 : f32 to vector<8x128xf32>
    %15 = arith.maximumf %13, %14 : vector<8x128xf32>
    %16 = arith.truncf %15 : vector<8x128xf32> to vector<8x128xbf16>
    %c0_12 = arith.constant 0 : index
    %c0_13 = arith.constant 0 : index
    %17 = vector.load %arg6[%c0_12, %c0_13] : memref<128x128xbf16, #tpu.memory_space<vmem>>, vector<128x128xbf16>
    %cst_14 = arith.constant dense<0.000000e+00> : vector<8x128xf32>
    %18 = tpu.matmul %16, %17, %cst_14 {dimension_numbers = #tpu.dot_dimension_numbers<[1], [0], [0], [1], [0, 0, 1, 1], [], []>} : vector<8x128xbf16>, vector<128x128xbf16>, vector<8x128xf32> -> vector<8x128xf32>
    %c0_15 = arith.constant 0 : index
    %c0_16 = arith.constant 0 : index
    %19 = vector.load %arg7[%c0_15, %c0_16] : memref<1x128xf32, #tpu.memory_space<vmem>>, vector<1x128xf32>
    %20 = vector.broadcast %19 : vector<1x128xf32> to vector<8x128xf32>
    %21 = arith.addf %18, %20 : vector<8x128xf32>
    %cst_17 = arith.constant 0.000000e+00 : f32
    %22 = vector.broadcast %cst_17 : f32 to vector<8x128xf32>
    %23 = arith.maximumf %21, %22 : vector<8x128xf32>
    %24 = arith.truncf %23 : vector<8x128xf32> to vector<8x128xbf16>
    %c0_18 = arith.constant 0 : index
    %c0_19 = arith.constant 0 : index
    %25 = vector.load %arg8[%c0_18, %c0_19] : memref<128x128xbf16, #tpu.memory_space<vmem>>, vector<128x128xbf16>
    %cst_20 = arith.constant dense<0.000000e+00> : vector<8x128xf32>
    %26 = tpu.matmul %24, %25, %cst_20 {dimension_numbers = #tpu.dot_dimension_numbers<[1], [0], [0], [1], [0, 0, 1, 1], [], []>} : vector<8x128xbf16>, vector<128x128xbf16>, vector<8x128xf32> -> vector<8x128xf32>
    %c0_21 = arith.constant 0 : index
    %c0_22 = arith.constant 0 : index
    %27 = vector.load %arg9[%c0_21, %c0_22] : memref<1x128xf32, #tpu.memory_space<vmem>>, vector<1x128xf32>
    %28 = vector.broadcast %27 : vector<1x128xf32> to vector<8x128xf32>
    %29 = arith.addf %26, %28 : vector<8x128xf32>
    %cst_23 = arith.constant dense<0xFF800000> : vector<8xf32>
    %30 = vector.multi_reduction <maximumf>, %29, %cst_23 [1] : vector<8x128xf32> to vector<8xf32>
    %31 = vector.shape_cast %30 : vector<8xf32> to vector<8x1xf32>
    %32 = vector.broadcast %31 : vector<8x1xf32> to vector<8x128xf32>
    %33 = arith.subf %29, %32 : vector<8x128xf32>
    %34 = math.exp %33 : vector<8x128xf32>
    %cst_24 = arith.constant dense<0.000000e+00> : vector<8xf32>
    %35 = vector.multi_reduction <add>, %34, %cst_24 [1] : vector<8x128xf32> to vector<8xf32>
    %36 = vector.shape_cast %35 : vector<8xf32> to vector<8x1xf32>
    %37 = tpu.reciprocal %36 {approx = true} : vector<8x1xf32> -> vector<8x1xf32>
    %38 = vector.broadcast %37 : vector<8x1xf32> to vector<8x128xf32>
    %39 = arith.mulf %34, %38 : vector<8x128xf32>
    %c0_25 = arith.constant 0 : index
    %c0_26 = arith.constant 0 : index
    %40 = vector.load %arg10[%c0_25, %c0_26] : memref<8x128xf32, #tpu.memory_space<vmem>>, vector<8x128xf32>
    tpu.vector_store %arg10[%c0_25, %c0_26], %39 {strides = array<i32>} : memref<8x128xf32, #tpu.memory_space<vmem>>, vector<8x128xf32>,
    return
  }
  func.func @transform_0(%arg0: i32) -> (i32, i32) {
    %c0_i32 = arith.constant 0 : i32
    %c0_i32_0 = arith.constant 0 : i32
    return %arg0, %c0_i32 : i32, i32
  }
  func.func @transform_1(%arg0: i32) -> (i32, i32) {
    %c0_i32 = arith.constant 0 : i32
    %c0_i32_0 = arith.constant 0 : i32
    %c0_i32_1 = arith.constant 0 : i32
    return %c0_i32, %c0_i32_0 : i32, i32
  }
  func.func @transform_2(%arg0: i32) -> (i32, i32) {
    %c0_i32 = arith.constant 0 : i32
    %c0_i32_0 = arith.constant 0 : i32
    %c0_i32_1 = arith.constant 0 : i32
    return %c0_i32, %c0_i32_0 : i32, i32
  }
  func.func @transform_3(%arg0: i32) -> (i32, i32) {
    %c0_i32 = arith.constant 0 : i32
    %c0_i32_0 = arith.constant 0 : i32
    %c0_i32_1 = arith.constant 0 : i32
    return %c0_i32, %c0_i32_0 : i32, i32
  }
  func.func @transform_4(%arg0: i32) -> (i32, i32) {
    %c0_i32 = arith.constant 0 : i32
    %c0_i32_0 = arith.constant 0 : i32
    %c0_i32_1 = arith.constant 0 : i32
    return %c0_i32, %c0_i32_0 : i32, i32
  }
  func.func @transform_5(%arg0: i32) -> (i32, i32) {
    %c0_i32 = arith.constant 0 : i32
    %c0_i32_0 = arith.constant 0 : i32
    %c0_i32_1 = arith.constant 0 : i32
    return %c0_i32, %c0_i32_0 : i32, i32
  }
  func.func @transform_6(%arg0: i32) -> (i32, i32) {
    %c0_i32 = arith.constant 0 : i32
    %c0_i32_0 = arith.constant 0 : i32
    %c0_i32_1 = arith.constant 0 : i32
    return %c0_i32, %c0_i32_0 : i32, i32
  }
  func.func @transform_7(%arg0: i32) -> (i32, i32) {
    %c0_i32 = arith.constant 0 : i32
    %c0_i32_0 = arith.constant 0 : i32
    %c0_i32_1 = arith.constant 0 : i32
    return %c0_i32, %c0_i32_0 : i32, i32
  }
  func.func @transform_8(%arg0: i32) -> (i32, i32) {
    %c0_i32 = arith.constant 0 : i32
    %c0_i32_0 = arith.constant 0 : i32
    %c0_i32_1 = arith.constant 0 : i32
    return %c0_i32, %c0_i32_0 : i32, i32
  }
  func.func @transform_9(%arg0: i32) -> (i32, i32) {
    %c0_i32 = arith.constant 0 : i32
    %c0_i32_0 = arith.constant 0 : i32
    return %arg0, %c0_i32 : i32, i32
  }
}

</mosaic_0001>

<llo_original>
// kernel: dqn_forward.1
$region0: #{dqn_forward.1}
  #allocation0 [shape = 'u32[]', space=smem, size = 0x4, offset = 0x4, fixed_abs, tag = 'smem constant byte address 0x4 - core index']
  #allocation1 [shape = 'u32[144,128]{1,0:T(1,128)}', space=vmem, size = 0x12000, scoped, tag = 'internal scratch']
  %s0 = inlined_call_operand.vmem [shape: bf16[8,11], index: 0, kind: input, shape index: {}]
  %s1 = inlined_call_operand.vmem [shape: bf16[11,128], index: 1, kind: input, shape index: {}]
  %s2 = inlined_call_operand.vmem [shape: f32[1,128], index: 2, kind: input, shape index: {}]
  %s3 = inlined_call_operand.vmem [shape: bf16[128,128], index: 3, kind: input, shape index: {}]
  %s4 = inlined_call_operand.vmem [shape: f32[1,128], index: 4, kind: input, shape index: {}]
  %s5 = inlined_call_operand.vmem [shape: bf16[128,128], index: 5, kind: input, shape index: {}]
  %s6 = inlined_call_operand.vmem [shape: f32[1,128], index: 6, kind: input, shape index: {}]
  %s7 = inlined_call_operand.vmem [shape: bf16[128,128], index: 7, kind: input, shape index: {}]
  %s8 = inlined_call_operand.vmem [shape: f32[1,128], index: 8, kind: input, shape index: {}]
  %s9 = inlined_call_operand.vmem [shape: f32[8,128], index: 9, kind: output, shape index: {}]
  %s10 = sld [smem:[#allocation0]]
  $region46: #{dqn_forward.1} parent=0
    _
  %s12 = ssub.s32 1, %s10
  %s13 = scalar_select 0, %s12, %s10
  // Predicated region
  $region2: #{dqn_forward.1} parent=0 // pred_check
    _
  $region3: #{dqn_forward.1} parent=0 // pred_check_branch
    %15 = sbr.rel (0) target = $region5
  $region4: #{dqn_forward.1} parent=0 // pred_region
    _
  $region5: #{dqn_forward.1} parent=0 // pred_fallthru
    _
  // Predicated region
  $region6: #{dqn_forward.1} parent=0 // pred_check
    _
  $region7: #{dqn_forward.1} parent=0 // pred_check_branch
    %17 = sbr.rel (0) target = $region9
  $region8: #{dqn_forward.1} parent=0 // pred_region
    _
  $region9: #{dqn_forward.1} parent=0 // pred_fallthru
    _
  // Predicated region
  $region10: #{dqn_forward.1} parent=0 // pred_check
    _
  $region11: #{dqn_forward.1} parent=0 // pred_check_branch
    %19 = sbr.rel (0) target = $region13
  $region12: #{dqn_forward.1} parent=0 // pred_region
    _
  $region13: #{dqn_forward.1} parent=0 // pred_fallthru
    _
  // Predicated region
  $region14: #{dqn_forward.1} parent=0 // pred_check
    _
  $region15: #{dqn_forward.1} parent=0 // pred_check_branch
    %21 = sbr.rel (0) target = $region17
  $region16: #{dqn_forward.1} parent=0 // pred_region
    _
  $region17: #{dqn_forward.1} parent=0 // pred_fallthru
    _
  // Predicated region
  $region18: #{dqn_forward.1} parent=0 // pred_check
    _
  $region19: #{dqn_forward.1} parent=0 // pred_check_branch
    %23 = sbr.rel (0) target = $region21
  $region20: #{dqn_forward.1} parent=0 // pred_region
    _
  $region21: #{dqn_forward.1} parent=0 // pred_fallthru
    _
  // Predicated region
  $region22: #{dqn_forward.1} parent=0 // pred_check
    _
  $region23: #{dqn_forward.1} parent=0 // pred_check_branch
    %25 = sbr.rel (0) target = $region25
  $region24: #{dqn_forward.1} parent=0 // pred_region
    _
  $region25: #{dqn_forward.1} parent=0 // pred_fallthru
    _
  // Predicated region
  $region26: #{dqn_forward.1} parent=0 // pred_check
    _
  $region27: #{dqn_forward.1} parent=0 // pred_check_branch
    %27 = sbr.rel (0) target = $region29
  $region28: #{dqn_forward.1} parent=0 // pred_region
    _
  $region29: #{dqn_forward.1} parent=0 // pred_fallthru
    _
  // Predicated region
  $region30: #{dqn_forward.1} parent=0 // pred_check
    _
  $region31: #{dqn_forward.1} parent=0 // pred_check_branch
    %29 = sbr.rel (0) target = $region33
  $region32: #{dqn_forward.1} parent=0 // pred_region
    _
  $region33: #{dqn_forward.1} parent=0 // pred_fallthru
    _
  // Predicated region
  $region34: #{dqn_forward.1} parent=0 // pred_check
    _
  $region35: #{dqn_forward.1} parent=0 // pred_check_branch
    %31 = sbr.rel (0) target = $region37
  $region36: #{dqn_forward.1} parent=0 // pred_region
    _
  $region37: #{dqn_forward.1} parent=0 // pred_fallthru
    _
  %v33 = vld [vmem:[%s0] sm:$0xf]
  %v34 = vld [vmem:[%s1] sm:$0xf]
  %v35 = vld [vmem:[%s1 + $0x4] sm:$0x3]
  %v36 = vld [vmem:[%s2] sm:$0x1]
  %v38 = vlaneseq
  %v39 = vshrl.u32 %v38, 7
  %v40 = vsub.s32 0, %v39
  %v41 = vrot.slane %v36, %v40
  %v45 = vunpack.c.l.b16 %v34
  %v46 = vunpack.c.l.b16 %v35
  %v47 = vpack.c.b16 %v46, %v45
  %vm48 = vcmask 89088
  %v50 = vsel %vm48, %v33, 0
  %vm52 = vcmask 1044480
  %vm53 = vcmask 1045504
  %v54 = vsel %vm52, 4294967295, 65535
  %v55 = vsel %vm53, %v54, 0
  %v57 = vand.u32 %v47, %v55
  %59 = vmatprep.subr.bf16.mxu0 0
  %60 = vmatpush1.bf16.msra.mxu0 %v57
  %61 = vmatprep.subr.bf16.mxu0 0
  %62 = vmatpush1.bf16.msra.mxu0 0
  %63 = vmatprep.subr.bf16.mxu0 0
  %64 = vmatpush1.bf16.msra.mxu0 0
  %65 = vmatprep.subr.bf16.mxu0 0
  %66 = vmatpush1.bf16.msra.mxu0 0
  %67 = vmatprep.subr.bf16.mxu0 0
  %68 = vmatpush1.bf16.msra.mxu0 0
  %69 = vmatprep.subr.bf16.mxu0 0
  %70 = vmatpush1.bf16.msra.mxu0 0
  %71 = vmatprep.subr.bf16.mxu0 0
  %72 = vmatpush1.bf16.msra.mxu0 0
  %73 = vmatprep.subr.bf16.mxu0 0
  %74 = vmatpush1.bf16.msra.mxu0 0
  %75 = vmatprep.subr.bf16.mxu0 0
  %76 = vmatpush1.bf16.msra.mxu0 0
  %77 = vmatprep.subr.bf16.mxu0 0
  %78 = vmatpush1.bf16.msra.mxu0 0
  %79 = vmatprep.subr.bf16.mxu0 0
  %80 = vmatpush1.bf16.msra.mxu0 0
  %81 = vmatprep.subr.bf16.mxu0 0
  %82 = vmatpush1.bf16.msra.mxu0 0
  %83 = vmatprep.subr.bf16.mxu0 0
  %84 = vmatpush1.bf16.msra.mxu0 0
  %85 = vmatprep.subr.bf16.mxu0 0
  %86 = vmatpush1.bf16.msra.mxu0 0
  %87 = vmatprep.subr.bf16.mxu0 0
  %88 = vmatpush1.bf16.msra.mxu0 0
  %89 = vmatprep.subr.bf16.mxu0 0
  %90 = vmatpush1.bf16.msra.mxu0 0
  %91 = vmatprep.mubr.bf16.mxu0 0
  %92 = vmatmul.mubr.bf16.gmra.mrb[0].mxu0 %v50
  %v93 = vpop.f32.mrb[0].mxu0
  %v94 = vadd.f32 %v41, %v93
  %v95 = vpop.f32.mrb[0].mxu0
  %v96 = vpop.f32.mrb[0].mxu0
  %v97 = vpop.f32.mrb[0].mxu0
  %98 = vdwg.mxu0
  %v99 = vmax.f32 %v94, 0.0
  %v100 = vpack.c.bf16 %v99, %v99
  %v101 = vld [vmem:[%s3] sm:$0xf]
  %v102 = vld [vmem:[%s3 + $0x4] sm:$0xf]
  %v103 = vld [vmem:[%s3 + $0x8] sm:$0xf]
  %v104 = vld [vmem:[%s3 + $0xc] sm:$0xf]
  %v105 = vld [vmem:[%s3 + $0x10] sm:$0xf]
  %v106 = vld [vmem:[%s3 + $0x14] sm:$0xf]
  %v107 = vld [vmem:[%s3 + $0x18] sm:$0xf]
  %v108 = vld [vmem:[%s3 + $0x1c] sm:$0xf]
  %v109 = vld [vmem:[%s3 + $0x20] sm:$0xf]
  %v110 = vld [vmem:[%s3 + $0x24] sm:$0xf]
  %v111 = vld [vmem:[%s3 + $0x28] sm:$0xf]
  %v112 = vld [vmem:[%s3 + $0x2c] sm:$0xf]
  %v113 = vld [vmem:[%s3 + $0x30] sm:$0xf]
  %v114 = vld [vmem:[%s3 + $0x34] sm:$0xf]
  %v115 = vld [vmem:[%s3 + $0x38] sm:$0xf]
  %v116 = vld [vmem:[%s3 + $0x3c] sm:$0xf]
  %v117 = vld [vmem:[%s4] sm:$0x1]
  %v119 = vlaneseq
  %v120 = vshrl.u32 %v119, 7
  %v121 = vsub.s32 0, %v120
  %v122 = vrot.slane %v117, %v121
  %v140 = vunpack.c.l.b16 %v101
  %v141 = vunpack.c.l.b16 %v102
  %v142 = vunpack.c.l.b16 %v103
  %v143 = vunpack.c.l.b16 %v104
  %v144 = vunpack.c.l.b16 %v105
  %v145 = vunpack.c.l.b16 %v106
  %v146 = vunpack.c.l.b16 %v107
  %v147 = vunpack.c.l.b16 %v108
  %v148 = vunpack.c.l.b16 %v109
  %v149 = vunpack.c.l.b16 %v110
  %v150 = vunpack.c.l.b16 %v111
  %v151 = vunpack.c.l.b16 %v112
  %v152 = vunpack.c.l.b16 %v113
  %v153 = vunpack.c.l.b16 %v114
  %v154 = vunpack.c.l.b16 %v115
  %v155 = vunpack.c.l.b16 %v116
  %v156 = vpack.c.b16 %v141, %v140
  %v157 = vpack.c.b16 %v143, %v142
  %v158 = vpack.c.b16 %v145, %v144
  %v159 = vpack.c.b16 %v147, %v146
  %v160 = vpack.c.b16 %v149, %v148
  %v161 = vpack.c.b16 %v151, %v150
  %v162 = vpack.c.b16 %v153, %v152
  %v163 = vpack.c.b16 %v155, %v154
  %172 = vmatprep.subr.bf16.mxu0 0
  %173 = vmatpush1.bf16.msra.mxu0 %v156
  %174 = vmatprep.subr.bf16.mxu0 0
  %175 = vmatpush1.bf16.msra.mxu0 %v157
  %176 = vmatprep.subr.bf16.mxu0 0
  %177 = vmatpush1.bf16.msra.mxu0 %v158
  %178 = vmatprep.subr.bf16.mxu0 0
  %179 = vmatpush1.bf16.msra.mxu0 %v159
  %180 = vmatprep.subr.bf16.mxu0 0
  %181 = vmatpush1.bf16.msra.mxu0 %v160
  %182 = vmatprep.subr.bf16.mxu0 0
  %183 = vmatpush1.bf16.msra.mxu0 %v161
  %184 = vmatprep.subr.bf16.mxu0 0
  %185 = vmatpush1.bf16.msra.mxu0 %v162
  %186 = vmatprep.subr.bf16.mxu0 0
  %187 = vmatpush1.bf16.msra.mxu0 %v163
  %188 = vmatprep.subr.bf16.mxu0 0
  %189 = vmatpush1.bf16.msra.mxu0 0
  %190 = vmatprep.subr.bf16.mxu0 0
  %191 = vmatpush1.bf16.msra.mxu0 0
  %192 = vmatprep.subr.bf16.mxu0 0
  %193 = vmatpush1.bf16.msra.mxu0 0
  %194 = vmatprep.subr.bf16.mxu0 0
  %195 = vmatpush1.bf16.msra.mxu0 0
  %196 = vmatprep.subr.bf16.mxu0 0
  %197 = vmatpush1.bf16.msra.mxu0 0
  %198 = vmatprep.subr.bf16.mxu0 0
  %199 = vmatpush1.bf16.msra.mxu0 0
  %200 = vmatprep.subr.bf16.mxu0 0
  %201 = vmatpush1.bf16.msra.mxu0 0
  %202 = vmatprep.subr.bf16.mxu0 0
  %203 = vmatpush1.bf16.msra.mxu0 0
  %204 = vmatprep.mubr.bf16.mxu0 0
  %205 = vmatmul.mubr.bf16.gmra.mrb[0].mxu0 %v100
  %v206 = vpop.f32.mrb[0].mxu0
  %v207 = vadd.f32 %v122, %v206
  %v208 = vpop.f32.mrb[0].mxu0
  %v209 = vpop.f32.mrb[0].mxu0
  %v210 = vpop.f32.mrb[0].mxu0
  %211 = vdwg.mxu0
  %v212 = vmax.f32 %v207, 0.0
  %v213 = vpack.c.bf16 %v212, %v212
  %v214 = vld [vmem:[%s5] sm:$0xf]
  %v215 = vld [vmem:[%s5 + $0x4] sm:$0xf]
  %v216 = vld [vmem:[%s5 + $0x8] sm:$0xf]
  %v217 = vld [vmem:[%s5 + $0xc] sm:$0xf]
  %v218 = vld [vmem:[%s5 + $0x10] sm:$0xf]
  %v219 = vld [vmem:[%s5 + $0x14] sm:$0xf]
  %v220 = vld [vmem:[%s5 + $0x18] sm:$0xf]
  %v221 = vld [vmem:[%s5 + $0x1c] sm:$0xf]
  %v222 = vld [vmem:[%s5 + $0x20] sm:$0xf]
  %v223 = vld [vmem:[%s5 + $0x24] sm:$0xf]
  %v224 = vld [vmem:[%s5 + $0x28] sm:$0xf]
  %v225 = vld [vmem:[%s5 + $0x2c] sm:$0xf]
  %v226 = vld [vmem:[%s5 + $0x30] sm:$0xf]
  %v227 = vld [vmem:[%s5 + $0x34] sm:$0xf]
  %v228 = vld [vmem:[%s5 + $0x38] sm:$0xf]
  %v229 = vld [vmem:[%s5 + $0x3c] sm:$0xf]
  %v230 = vld [vmem:[%s6] sm:$0x1]
  %v232 = vlaneseq
  %v233 = vshrl.u32 %v232, 7
  %v234 = vsub.s32 0, %v233
  %v235 = vrot.slane %v230, %v234
  %v253 = vunpack.c.l.b16 %v214
  %v254 = vunpack.c.l.b16 %v215
  %v255 = vunpack.c.l.b16 %v216
  %v256 = vunpack.c.l.b16 %v217
  %v257 = vunpack.c.l.b16 %v218
  %v258 = vunpack.c.l.b16 %v219
  %v259 = vunpack.c.l.b16 %v220
  %v260 = vunpack.c.l.b16 %v221
  %v261 = vunpack.c.l.b16 %v222
  %v262 = vunpack.c.l.b16 %v223
  %v263 = vunpack.c.l.b16 %v224
  %v264 = vunpack.c.l.b16 %v225
  %v265 = vunpack.c.l.b16 %v226
  %v266 = vunpack.c.l.b16 %v227
  %v267 = vunpack.c.l.b16 %v228
  %v268 = vunpack.c.l.b16 %v229
  %v269 = vpack.c.b16 %v254, %v253
  %v270 = vpack.c.b16 %v256, %v255
  %v271 = vpack.c.b16 %v258, %v257
  %v272 = vpack.c.b16 %v260, %v259
  %v273 = vpack.c.b16 %v262, %v261
  %v274 = vpack.c.b16 %v264, %v263
  %v275 = vpack.c.b16 %v266, %v265
  %v276 = vpack.c.b16 %v268, %v267
  %285 = vmatprep.subr.bf16.mxu0 0
  %286 = vmatpush1.bf16.msra.mxu0 %v269
  %287 = vmatprep.subr.bf16.mxu0 0
  %288 = vmatpush1.bf16.msra.mxu0 %v270
  %289 = vmatprep.subr.bf16.mxu0 0
  %290 = vmatpush1.bf16.msra.mxu0 %v271
  %291 = vmatprep.subr.bf16.mxu0 0
  %292 = vmatpush1.bf16.msra.mxu0 %v272
  %293 = vmatprep.subr.bf16.mxu0 0
  %294 = vmatpush1.bf16.msra.mxu0 %v273
  %295 = vmatprep.subr.bf16.mxu0 0
  %296 = vmatpush1.bf16.msra.mxu0 %v274
  %297 = vmatprep.subr.bf16.mxu0 0
  %298 = vmatpush1.bf16.msra.mxu0 %v275
  %299 = vmatprep.subr.bf16.mxu0 0
  %300 = vmatpush1.bf16.msra.mxu0 %v276
  %301 = vmatprep.subr.bf16.mxu0 0
  %302 = vmatpush1.bf16.msra.mxu0 0
  %303 = vmatprep.subr.bf16.mxu0 0
  %304 = vmatpush1.bf16.msra.mxu0 0
  %305 = vmatprep.subr.bf16.mxu0 0
  %306 = vmatpush1.bf16.msra.mxu0 0
  %307 = vmatprep.subr.bf16.mxu0 0
  %308 = vmatpush1.bf16.msra.mxu0 0
  %309 = vmatprep.subr.bf16.mxu0 0
  %310 = vmatpush1.bf16.msra.mxu0 0
  %311 = vmatprep.subr.bf16.mxu0 0
  %312 = vmatpush1.bf16.msra.mxu0 0
  %313 = vmatprep.subr.bf16.mxu0 0
  %314 = vmatpush1.bf16.msra.mxu0 0
  %315 = vmatprep.subr.bf16.mxu0 0
  %316 = vmatpush1.bf16.msra.mxu0 0
  %317 = vmatprep.mubr.bf16.mxu0 0
  %318 = vmatmul.mubr.bf16.gmra.mrb[0].mxu0 %v213
  %v319 = vpop.f32.mrb[0].mxu0
  %v320 = vadd.f32 %v235, %v319
  %v321 = vpop.f32.mrb[0].mxu0
  %v322 = vpop.f32.mrb[0].mxu0
  %v323 = vpop.f32.mrb[0].mxu0
  %324 = vdwg.mxu0
  %v325 = vmax.f32 %v320, 0.0
  %v326 = vpack.c.bf16 %v325, %v325
  %v327 = vld [vmem:[%s7] sm:$0xf]
  %v328 = vld [vmem:[%s7 + $0x4] sm:$0xf]
  %v329 = vld [vmem:[%s7 + $0x8] sm:$0xf]
  %v330 = vld [vmem:[%s7 + $0xc] sm:$0xf]
  %v331 = vld [vmem:[%s7 + $0x10] sm:$0xf]
  %v332 = vld [vmem:[%s7 + $0x14] sm:$0xf]
  %v333 = vld [vmem:[%s7 + $0x18] sm:$0xf]
  %v334 = vld [vmem:[%s7 + $0x1c] sm:$0xf]
  %v335 = vld [vmem:[%s7 + $0x20] sm:$0xf]
  %v336 = vld [vmem:[%s7 + $0x24] sm:$0xf]
  %v337 = vld [vmem:[%s7 + $0x28] sm:$0xf]
  %v338 = vld [vmem:[%s7 + $0x2c] sm:$0xf]
  %v339 = vld [vmem:[%s7 + $0x30] sm:$0xf]
  %v340 = vld [vmem:[%s7 + $0x34] sm:$0xf]
  %v341 = vld [vmem:[%s7 + $0x38] sm:$0xf]
  %v342 = vld [vmem:[%s7 + $0x3c] sm:$0xf]
  %v343 = vld [vmem:[%s8] sm:$0x1]
  %v345 = vlaneseq
  %v346 = vshrl.u32 %v345, 7
  %v347 = vsub.s32 0, %v346
  %v348 = vrot.slane %v343, %v347
  %v366 = vunpack.c.l.b16 %v327
  %v367 = vunpack.c.l.b16 %v328
  %v368 = vunpack.c.l.b16 %v329
  %v369 = vunpack.c.l.b16 %v330
  %v370 = vunpack.c.l.b16 %v331
  %v371 = vunpack.c.l.b16 %v332
  %v372 = vunpack.c.l.b16 %v333
  %v373 = vunpack.c.l.b16 %v334
  %v374 = vunpack.c.l.b16 %v335
  %v375 = vunpack.c.l.b16 %v336
  %v376 = vunpack.c.l.b16 %v337
  %v377 = vunpack.c.l.b16 %v338
  %v378 = vunpack.c.l.b16 %v339
  %v379 = vunpack.c.l.b16 %v340
  %v380 = vunpack.c.l.b16 %v341
  %v381 = vunpack.c.l.b16 %v342
  %v382 = vpack.c.b16 %v367, %v366
  %v383 = vpack.c.b16 %v369, %v368
  %v384 = vpack.c.b16 %v371, %v370
  %v385 = vpack.c.b16 %v373, %v372
  %v386 = vpack.c.b16 %v375, %v374
  %v387 = vpack.c.b16 %v377, %v376
  %v388 = vpack.c.b16 %v379, %v378
  %v389 = vpack.c.b16 %v381, %v380
  %398 = vmatprep.subr.bf16.mxu0 0
  %399 = vmatpush1.bf16.msra.mxu0 %v382
  %400 = vmatprep.subr.bf16.mxu0 0
  %401 = vmatpush1.bf16.msra.mxu0 %v383
  %402 = vmatprep.subr.bf16.mxu0 0
  %403 = vmatpush1.bf16.msra.mxu0 %v384
  %404 = vmatprep.subr.bf16.mxu0 0
  %405 = vmatpush1.bf16.msra.mxu0 %v385
  %406 = vmatprep.subr.bf16.mxu0 0
  %407 = vmatpush1.bf16.msra.mxu0 %v386
  %408 = vmatprep.subr.bf16.mxu0 0
  %409 = vmatpush1.bf16.msra.mxu0 %v387
  %410 = vmatprep.subr.bf16.mxu0 0
  %411 = vmatpush1.bf16.msra.mxu0 %v388
  %412 = vmatprep.subr.bf16.mxu0 0
  %413 = vmatpush1.bf16.msra.mxu0 %v389
  %414 = vmatprep.subr.bf16.mxu0 0
  %415 = vmatpush1.bf16.msra.mxu0 0
  %416 = vmatprep.subr.bf16.mxu0 0
  %417 = vmatpush1.bf16.msra.mxu0 0
  %418 = vmatprep.subr.bf16.mxu0 0
  %419 = vmatpush1.bf16.msra.mxu0 0
  %420 = vmatprep.subr.bf16.mxu0 0
  %421 = vmatpush1.bf16.msra.mxu0 0
  %422 = vmatprep.subr.bf16.mxu0 0
  %423 = vmatpush1.bf16.msra.mxu0 0
  %424 = vmatprep.subr.bf16.mxu0 0
  %425 = vmatpush1.bf16.msra.mxu0 0
  %426 = vmatprep.subr.bf16.mxu0 0
  %427 = vmatpush1.bf16.msra.mxu0 0
  %428 = vmatprep.subr.bf16.mxu0 0
  %429 = vmatpush1.bf16.msra.mxu0 0
  %430 = vmatprep.mubr.bf16.mxu0 0
  %431 = vmatmul.mubr.bf16.gmra.mrb[0].mxu0 %v326
  %v432 = vpop.f32.mrb[0].mxu0
  %v433 = vadd.f32 %v348, %v432
  %v434 = vpop.f32.mrb[0].mxu0
  %v435 = vpop.f32.mrb[0].mxu0
  %v436 = vpop.f32.mrb[0].mxu0
  %437 = vdwg.mxu0
  %438 = vmax.xlane.f32.xlu0 %v433
  %v439 = vpop.xlane.xlu0 %438
  %v440 = vsub.f32 %v433, %v439
  %v441 = vmul.f32 %v440, 1.442695
  %v442 = vpow.pop %v441
  %443 = vadd.xlane.f32.xlu0 %v442
  %v444 = vpop.xlane.xlu0 %443
  %v445 = vrcp.pop %v444
  %v446 = vmul.f32 %v442, %v445
  %447 = vst [vmem:[%s9] sm:$0xff] %v446
  // Predicated region
  $region38: #{dqn_forward.1} parent=0 // pred_check
    _
  $region39: #{dqn_forward.1} parent=0 // pred_check_branch
    %449 = sbr.rel (0) target = $region41
  $region40: #{dqn_forward.1} parent=0 // pred_region
    _
  $region41: #{dqn_forward.1} parent=0 // pred_fallthru
    _
  // Predicated region
  $region42: #{dqn_forward.1} parent=0 // pred_check
    _
  $region43: #{dqn_forward.1} parent=0 // pred_check_branch
    %451 = sbr.rel (0) target = $region45
  $region44: #{dqn_forward.1} parent=0 // pred_region
    _
  $region45: #{dqn_forward.1} parent=0 // pred_fallthru
    _

</llo_original>
